<compile_context>
chip_gen: v7x
topology: tpu7x:2x2x1
jax: 0.10.0
libtpu: 0.0.40
codegen_flags: <defaults>
</compile_context>

<pallas_src>
import functools

import jax
import jax.numpy as jnp
from jax.experimental import pallas as pl
from jax.experimental.pallas import tpu as pltpu


def _cdiv(a, b):
    return -(-a // b)


def _round_up(a, b):
    return _cdiv(a, b) * b


def _vmem_capacity_bytes():
    """Per-TensorCore VMEM capacity (128 MiB on v5e/v6e, 64 MiB on v7x)."""
    try:
        return int(pltpu.get_tpu_info().vmem_capacity_bytes)
    except Exception:
        pass
    try:
        if "v7" in jax.devices()[0].device_kind.lower():
            return 64 * 1024 * 1024
    except Exception:
        pass
    return 128 * 1024 * 1024


def _vmem_plan():
    """(per-step block budget, scoped vmem_limit_bytes) for this generation."""
    cap = _vmem_capacity_bytes()
    if cap >= 100 * 1024 * 1024:              # v5e / v6e class: 128 MiB physical
        return 32 * 1024 * 1024, 96 * 1024 * 1024
    # v7x class: 64 MiB per TensorCore -> stay well under it.
    limit = min(48 * 1024 * 1024, cap * 3 // 4)
    return min(20 * 1024 * 1024, limit // 2), limit


def _adain_rows_kernel(x_ref, w_ref, b_ref, o_ref, *, eps, inv_hw):
    """One (tm, hw) row block: per-row stats + fused affine in a single streamed pass."""
    x = x_ref[...]
    # f32-accumulated reductions straight off the native-dtype tile (no f32 copy).
    s = jnp.sum(x, axis=-1, keepdims=True, dtype=jnp.float32)
    ss = jnp.sum(jnp.square(x.astype(jnp.float32)), axis=-1, keepdims=True,
                 dtype=jnp.float32)
    mean = s * inv_hw
    var = jnp.maximum(ss * inv_hw - mean * mean, 0.0)     # biased variance, clamped
    scale = w_ref[...] * jax.lax.rsqrt(var + eps)          # rsqrt -> EUP slot
    shift = b_ref[...] - mean * scale
    o_ref[...] = (x.astype(jnp.float32) * scale + shift).astype(o_ref.dtype)


def _adain_hw_tiled_kernel(x_ref, w_ref, b_ref, o_ref, sum_ref, ss_ref, *,
                           eps, inv_hw, nhw):
    """Large-H*W fallback.

    Phase 0 (j < nhw): accumulate per-row sum / sum-sq into VMEM scratch.
    Phase 1 (j >= nhw): re-stream each spatial tile and apply the finalized affine.
    """
    j = pl.program_id(1)

    @pl.when(j == 0)
    def _():
        sum_ref[...] = jnp.zeros_like(sum_ref)
        ss_ref[...] = jnp.zeros_like(ss_ref)

    @pl.when(j < nhw)
    def _():
        x = x_ref[...]
        sum_ref[...] += jnp.sum(x, axis=-1, keepdims=True, dtype=jnp.float32)
        ss_ref[...] += jnp.sum(jnp.square(x.astype(jnp.float32)), axis=-1,
                               keepdims=True, dtype=jnp.float32)

    @pl.when(j >= nhw)
    def _():
        mean = sum_ref[...] * inv_hw
        var = jnp.maximum(ss_ref[...] * inv_hw - mean * mean, 0.0)
        scale = w_ref[...] * jax.lax.rsqrt(var + eps)
        shift = b_ref[...] - mean * scale
        o_ref[...] = (x_ref[...].astype(jnp.float32) * scale + shift).astype(o_ref.dtype)


def adaptive_instance_norm_2d(x, weight, bias, eps=1e-5, *, _vmem_budget_bytes=None):
    """x: (b, c, H, W); weight, bias: (b*c,) AdaIN affine params assigned externally."""
    b, c, H, W = x.shape
    bc = b * c
    hw = H * W
    eps = float(eps)
    inv_hw = 1.0 / hw

    budget, vmem_limit = _vmem_plan()
    if _vmem_budget_bytes is not None:       # test hook to force the fallback path
        budget = int(_vmem_budget_bytes)

    itemsize = jnp.dtype(x.dtype).itemsize
    sub = 8 * max(1, 4 // itemsize)          # sublane packing: 8 (f32) / 16 (bf16)

    hw_pad = _round_up(hw, 128)              # lane-dense spatial axis

    x2 = x.reshape(bc, hw)
    # Keep the (tiny) affine params in f32 for precision; per-step (tm, 1) blocks.
    w2 = weight.astype(jnp.float32).reshape(bc, 1)
    b2 = bias.astype(jnp.float32).reshape(bc, 1)

    bc_ceil = _round_up(bc, sub)
    # Per-row bytes of the double-buffered input + output blocks (native dtype).
    per_row = hw_pad * 4 * itemsize

    if per_row * sub <= budget:
        # --------------------------- row-tiled path (common) --------------------
        if hw_pad != hw:
            x2 = jnp.pad(x2, ((0, 0), (0, hw_pad - hw)))

        tm_cap = max(sub, (budget // per_row) // sub * sub)
        if tm_cap >= bc_ceil:
            # Whole problem would fit one tile: still emit 2 parallel steps (when
            # the rows allow it) so v7x's two TensorCores can split the grid.
            tm = _round_up(_cdiv(bc_ceil, 2), sub) if bc_ceil >= 2 * sub else bc_ceil
        else:
            tm = min(tm_cap, bc_ceil)
        grid_rows = _cdiv(bc, tm)
        # Prefer an even number of row tiles (>1) for v7x's 2-TC load balance.
        if grid_rows > 1 and grid_rows % 2 == 1:
            tm_alt = _round_up(_cdiv(bc_ceil, grid_rows + 1), sub)
            if tm_alt >= sub and _cdiv(bc, tm_alt) % 2 == 0:
                tm = tm_alt
                grid_rows = _cdiv(bc, tm)

        out2 = pl.pallas_call(
            functools.partial(_adain_rows_kernel, eps=eps, inv_hw=inv_hw),
            out_shape=jax.ShapeDtypeStruct((bc, hw_pad), x.dtype),
            grid_spec=pltpu.PrefetchScalarGridSpec(
                num_scalar_prefetch=0,
                grid=(grid_rows,),
                in_specs=[
                    pl.BlockSpec((tm, hw_pad), lambda i: (i, 0)),
                    pl.BlockSpec((tm, 1), lambda i: (i, 0)),
                    pl.BlockSpec((tm, 1), lambda i: (i, 0)),
                ],
                out_specs=pl.BlockSpec((tm, hw_pad), lambda i: (i, 0)),
            ),
            compiler_params=pltpu.CompilerParams(
                dimension_semantics=("parallel",),
                vmem_limit_bytes=vmem_limit,
            ),
        )(x2, w2, b2)
    else:
        # --------------------- spatially-tiled fallback (large H*W) -------------
        # Spatial tile sized so double-buffered in+out blocks fit at the minimum
        # row tile; then grow the row tile into any leftover budget.
        thw = max(128, (budget // (4 * itemsize * sub)) // 128 * 128)
        thw = min(thw, hw_pad)
        tm = max(sub, (budget // (4 * itemsize * thw)) // sub * sub)
        tm = min(tm, bc_ceil)
        hw_pad2 = _round_up(hw, thw)
        if hw_pad2 != hw:
            x2 = jnp.pad(x2, ((0, 0), (0, hw_pad2 - hw)))
        nhw = hw_pad2 // thw
        grid_rows = _cdiv(bc, tm)

        out2 = pl.pallas_call(
            functools.partial(_adain_hw_tiled_kernel, eps=eps, inv_hw=inv_hw,
                              nhw=nhw),
            out_shape=jax.ShapeDtypeStruct((bc, hw_pad2), x.dtype),
            grid_spec=pltpu.PrefetchScalarGridSpec(
                num_scalar_prefetch=0,
                grid=(grid_rows, 2 * nhw),
                in_specs=[
                    # Both phases stream spatial tile (j mod nhw).
                    pl.BlockSpec((tm, thw),
                                 lambda i, j: (i, jnp.where(j < nhw, j, j - nhw))),
                    pl.BlockSpec((tm, 1), lambda i, j: (i, 0)),
                    pl.BlockSpec((tm, 1), lambda i, j: (i, 0)),
                ],
                # Output block index stays at 0 during the stats phase (no flush),
                # then advances one spatial tile per apply step.
                out_specs=pl.BlockSpec(
                    (tm, thw), lambda i, j: (i, jnp.where(j < nhw, 0, j - nhw))),
                scratch_shapes=[pltpu.VMEM((tm, 1), jnp.float32),
                                pltpu.VMEM((tm, 1), jnp.float32)],
            ),
            compiler_params=pltpu.CompilerParams(
                dimension_semantics=("parallel", "arbitrary"),
                vmem_limit_bytes=vmem_limit,
            ),
        )(x2, w2, b2)
        hw_pad = hw_pad2

    if hw_pad != hw:
        out2 = out2[:, :hw]
    return out2.reshape(b, c, H, W)


def _reference(x, weight, bias, eps=1e-5):
    b, c, H, W = x.shape
    xr = x.reshape(b * c, H * W).astype(jnp.float32)
    mean = xr.mean(axis=-1, keepdims=True)
    var = ((xr - mean) ** 2).mean(axis=-1, keepdims=True)
    y = (xr - mean) / jnp.sqrt(var + eps) * weight[:, None] + bias[:, None]
    return y.reshape(b, c, H, W).astype(x.dtype)


if __name__ == "__main__":
    b, c, H, W = 2, 4, 16, 16
    num_features = c

    key = jax.random.PRNGKey(0)
    kx, kw, kb = jax.random.split(key, 3)

    x = jax.random.normal(kx, (b, c, H, W), dtype=jnp.float32)
    # AdaIN weight/bias are assigned externally before forward; shape (b * num_features,).
    weight = jax.random.normal(kw, (b * num_features,), dtype=jnp.float32) * 0.5 + 1.0
    bias = jax.random.normal(kb, (b * num_features,), dtype=jnp.float32) * 0.1

    ref = _reference(x, weight, bias, eps=1e-5)

    # Common row-tiled path.
    out = adaptive_instance_norm_2d(x, weight, bias, eps=1e-5)
    out = jax.block_until_ready(out)
    assert out.shape == (b, c, H, W)
    assert jnp.allclose(out, ref, atol=1e-4, rtol=1e-4)

    # Exercise the spatially-tiled fallback on the same small shape by forcing a
    # tiny per-step budget (thw=128, two spatial tiles) so the path stays validated.
    out_hw = adaptive_instance_norm_2d(x, weight, bias, eps=1e-5,
                                       _vmem_budget_bytes=16 * 1024)
    out_hw = jax.block_until_ready(out_hw)
    assert jnp.allclose(out_hw, ref, atol=1e-4, rtol=1e-4)

    print("KERNEL_OK")
</pallas_src>

<mosaic_0001>
module attributes {stable_mosaic.version = 11 : i64} {
  func.func @_adain_rows_kernel(%arg0: i32, %arg1: memref<8x256xf32, #tpu.memory_space<vmem>>, %arg2: memref<8x1xf32, #tpu.memory_space<vmem>>, %arg3: memref<8x1xf32, #tpu.memory_space<vmem>>, %arg4: memref<8x256xf32, #tpu.memory_space<vmem>>) attributes {dimension_semantics = [#tpu.dimension_semantics<parallel>], iteration_bounds = array<i64: 1>, scalar_prefetch = 0 : i64, scratch_operands = 0 : i64, tpu.core_type = #tpu.core_type<tc>, window_params = [{transform_indices = @transform_0, window_bounds = array<i64: 8, 256>}, {transform_indices = @transform_1, window_bounds = array<i64: 8, 1>}, {transform_indices = @transform_2, window_bounds = array<i64: 8, 1>}, {transform_indices = @transform_3, window_bounds = array<i64: 8, 256>}]} {
    %c0 = arith.constant 0 : index
    %c0_0 = arith.constant 0 : index
    %0 = vector.load %arg1[%c0, %c0_0] : memref<8x256xf32, #tpu.memory_space<vmem>>, vector<8x256xf32>
    %cst = arith.constant dense<0.000000e+00> : vector<8xf32>
    %1 = vector.multi_reduction <add>, %0, %cst [1] : vector<8x256xf32> to vector<8xf32>
    %2 = vector.shape_cast %1 : vector<8xf32> to vector<8x1xf32>
    %3 = arith.mulf %0, %0 : vector<8x256xf32>
    %cst_1 = arith.constant dense<0.000000e+00> : vector<8xf32>
    %4 = vector.multi_reduction <add>, %3, %cst_1 [1] : vector<8x256xf32> to vector<8xf32>
    %5 = vector.shape_cast %4 : vector<8xf32> to vector<8x1xf32>
    %cst_2 = arith.constant 3.906250e-03 : f32
    %6 = vector.broadcast %cst_2 : f32 to vector<8x1xf32>
    %7 = arith.mulf %2, %6 : vector<8x1xf32>
    %cst_3 = arith.constant 3.906250e-03 : f32
    %8 = vector.broadcast %cst_3 : f32 to vector<8x1xf32>
    %9 = arith.mulf %5, %8 : vector<8x1xf32>
    %10 = arith.mulf %7, %7 : vector<8x1xf32>
    %11 = arith.subf %9, %10 : vector<8x1xf32>
    %cst_4 = arith.constant 0.000000e+00 : f32
    %12 = vector.broadcast %cst_4 : f32 to vector<8x1xf32>
    %13 = arith.maximumf %11, %12 : vector<8x1xf32>
    %c0_5 = arith.constant 0 : index
    %c0_6 = arith.constant 0 : index
    %14 = vector.load %arg2[%c0_5, %c0_6] : memref<8x1xf32, #tpu.memory_space<vmem>>, vector<8x1xf32>
    %cst_7 = arith.constant 9.99999974E-6 : f32
    %15 = vector.broadcast %cst_7 : f32 to vector<8x1xf32>
    %16 = arith.addf %13, %15 : vector<8x1xf32>
    %17 = math.rsqrt %16 : vector<8x1xf32>
    %18 = arith.mulf %14, %17 : vector<8x1xf32>
    %c0_8 = arith.constant 0 : index
    %c0_9 = arith.constant 0 : index
    %19 = vector.load %arg3[%c0_8, %c0_9] : memref<8x1xf32, #tpu.memory_space<vmem>>, vector<8x1xf32>
    %20 = arith.mulf %7, %18 : vector<8x1xf32>
    %21 = arith.subf %19, %20 : vector<8x1xf32>
    %22 = vector.broadcast %18 : vector<8x1xf32> to vector<8x256xf32>
    %23 = arith.mulf %0, %22 : vector<8x256xf32>
    %24 = vector.broadcast %21 : vector<8x1xf32> to vector<8x256xf32>
    %25 = arith.addf %23, %24 : vector<8x256xf32>
    %c0_10 = arith.constant 0 : index
    %c0_11 = arith.constant 0 : index
    %26 = vector.load %arg4[%c0_10, %c0_11] : memref<8x256xf32, #tpu.memory_space<vmem>>, vector<8x256xf32>
    tpu.vector_store %arg4[%c0_10, %c0_11], %25 {strides = array<i32>} : memref<8x256xf32, #tpu.memory_space<vmem>>, vector<8x256xf32>,
    return
  }
  func.func @transform_0(%arg0: i32) -> (i32, i32) {
    %c0_i32 = arith.constant 0 : i32
    %c0_i32_0 = arith.constant 0 : i32
    return %arg0, %c0_i32 : i32, i32
  }
  func.func @transform_1(%arg0: i32) -> (i32, i32) {
    %c0_i32 = arith.constant 0 : i32
    %c0_i32_0 = arith.constant 0 : i32
    return %arg0, %c0_i32 : i32, i32
  }
  func.func @transform_2(%arg0: i32) -> (i32, i32) {
    %c0_i32 = arith.constant 0 : i32
    %c0_i32_0 = arith.constant 0 : i32
    return %arg0, %c0_i32 : i32, i32
  }
  func.func @transform_3(%arg0: i32) -> (i32, i32) {
    %c0_i32 = arith.constant 0 : i32
    %c0_i32_0 = arith.constant 0 : i32
    return %arg0, %c0_i32 : i32, i32
  }
}

</mosaic_0001>

<llo_original>
// kernel: tpu_custom_call.1
$region0: #{tpu_custom_call.1}
  #allocation0 [shape = 'u32[]', space=smem, size = 0x4, offset = 0x4, fixed_abs, tag = 'smem constant byte address 0x4 - core index']
  #allocation1 [shape = 'u32[144,128]{1,0:T(1,128)}', space=vmem, size = 0x12000, scoped, tag = 'internal scratch']
  %s0 = inlined_call_operand.hbm [shape: f32[8,256], index: 0, kind: input, shape index: {}]
  %s1 = inlined_call_operand.hbm [shape: f32[8,1], index: 1, kind: input, shape index: {}]
  %s2 = inlined_call_operand.hbm [shape: f32[8,1], index: 2, kind: input, shape index: {}]
  %s3 = inlined_call_operand.hbm [shape: f32[8,256], index: 3, kind: output, shape index: {}]
  %s4 = sld [smem:[#allocation0]]
  $region34: #{tpu_custom_call.1} parent=0
    _
  %s6 = ssub.s32 1, %s4
  %s7 = scalar_select 0, %s6, %s4
  $region1: #{tpu_custom_call.1} parent=0
    #allocation2 [shape = 'u8[8192]{0}', space=vmem, size = 0x2000, scoped, tag = 'input window, operand 0, single buffered']
    #allocation3 [shape = 's32[1]{0}', space=sflag, size = 0x4, scoped, tag = 'scoped memory for tpu_custom_call.1']
    #allocation4 [shape = 's32[1]{0}', space=sflag, size = 0x4, scoped, tag = 'scoped memory for tpu_custom_call.1']
    #allocation5 [shape = 'u8[4096]{0}', space=vmem, size = 0x1000, scoped, tag = 'input window, operand 1, single buffered']
    #allocation6 [shape = 's32[1]{0}', space=sflag, size = 0x4, scoped, tag = 'scoped memory for tpu_custom_call.1']
    #allocation7 [shape = 'u8[4096]{0}', space=vmem, size = 0x1000, scoped, tag = 'input window, operand 2, single buffered']
    #allocation8 [shape = 'u8[8192]{0}', space=vmem, size = 0x2000, scoped, tag = 'output window, operand 0, single buffered']
    %8 = vsyncpa [#allocation3], 0
    %9 = vsyncpa [#allocation6], 0
    %10 = vsyncpa [#allocation4], 0
    // Predicated region
    $region2: #{tpu_custom_call.1} parent=1 // pred_check
      _
    $region3: #{tpu_custom_call.1} parent=1 // pred_check_branch
      %12 = sbr.rel (0) target = $region5
    $region4: #{tpu_custom_call.1} parent=1 // pred_region
      %s14 = ssub.s32 256, 256
      %15 = vsyncadd [#allocation3], %s14
      %s17 = sshll.u32 [#allocation2], 4
      %s18 = int_to_ptr.vmem [resolvable:$true] %s17
      %20 = dma.hbm_to_vmem [thread:$0]  %s0, 256, %s18, [#allocation3]
    $region5: #{tpu_custom_call.1} parent=1 // pred_fallthru
      _
    // Predicated region
    $region6: #{tpu_custom_call.1} parent=1 // pred_check
      _
    $region7: #{tpu_custom_call.1} parent=1 // pred_check_branch
      %22 = sbr.rel (0) target = $region9
    $region8: #{tpu_custom_call.1} parent=1 // pred_region
      %s24 = ssub.s32 128, 128
      %25 = vsyncadd [#allocation6], %s24
      %s27 = sshll.u32 [#allocation5], 4
      %s28 = int_to_ptr.vmem [resolvable:$true] %s27
      %30 = dma.hbm_to_vmem [thread:$0]  %s1, 128, %s28, [#allocation6]
    $region9: #{tpu_custom_call.1} parent=1 // pred_fallthru
      _
    // Predicated region
    $region10: #{tpu_custom_call.1} parent=1 // pred_check
      _
    $region11: #{tpu_custom_call.1} parent=1 // pred_check_branch
      %32 = sbr.rel (0) target = $region13
    $region12: #{tpu_custom_call.1} parent=1 // pred_region
      %s34 = ssub.s32 128, 128
      %35 = vsyncadd [#allocation6], %s34
      %s37 = sshll.u32 [#allocation7], 4
      %s38 = int_to_ptr.vmem [resolvable:$true] %s37
      %40 = dma.hbm_to_vmem [thread:$0]  %s2, 128, %s38, [#allocation6]
    $region13: #{tpu_custom_call.1} parent=1 // pred_fallthru
      _
    // Predicated region
    $region14: #{tpu_custom_call.1} parent=1 // pred_check
      _
    $region15: #{tpu_custom_call.1} parent=1 // pred_check_branch
      %42 = sbr.rel (0) target = $region17
    $region16: #{tpu_custom_call.1} parent=1 // pred_region
      %43 = dma.done [#allocation3], 256
    $region17: #{tpu_custom_call.1} parent=1 // pred_fallthru
      _
    // Predicated region
    $region18: #{tpu_custom_call.1} parent=1 // pred_check
      _
    $region19: #{tpu_custom_call.1} parent=1 // pred_check_branch
      %45 = sbr.rel (0) target = $region21
    $region20: #{tpu_custom_call.1} parent=1 // pred_region
      %46 = dma.done [#allocation6], 128
    $region21: #{tpu_custom_call.1} parent=1 // pred_fallthru
      _
    // Predicated region
    $region22: #{tpu_custom_call.1} parent=1 // pred_check
      _
    $region23: #{tpu_custom_call.1} parent=1 // pred_check_branch
      %48 = sbr.rel (0) target = $region25
    $region24: #{tpu_custom_call.1} parent=1 // pred_region
      %49 = dma.done [#allocation6], 128
    $region25: #{tpu_custom_call.1} parent=1 // pred_fallthru
      _
    %v50 = vld [vmem:[#allocation2] sm:$0xff]
    %v51 = vld [vmem:[#allocation2 + $0x8] sm:$0xff]
    %v52 = vadd.f32 %v50, %v51
    %53 = vadd.xlane.f32.xlu0 %v52
    %v54 = vpop.xlane.xlu0 %53
    %v55 = vmul.f32 %v50, %v50
    %v56 = vmul.f32 %v51, %v51
    %v57 = vadd.f32 %v55, %v56
    %58 = vadd.xlane.f32.xlu0 %v57
    %v59 = vpop.xlane.xlu0 %58
    %v60 = vmul.f32 %v54, 0.00390625
    %v61 = vmul.f32 %v59, 0.00390625
    %v62 = vmul.f32 %v60, %v60
    %v63 = vsub.f32 %v61, %v62
    %v64 = vmax.f32 %v63, 0.0
    %v65 = vld [vmem:[#allocation5] sm:$0xff]
    %v66 = vadd.f32 %v64, 1e-05
    %v67 = vrsqrt.pop %v66
    %v68 = vmul.f32 %v65, %v67
    %v69 = vld [vmem:[#allocation7] sm:$0xff]
    %v70 = vmul.f32 %v60, %v68
    %v71 = vsub.f32 %v69, %v70
    %73 = vset.pattern.permute.xlu0 0
    %74 = vperm.xlu0 %73, %v68
    %v75 = vpop.permute.xlu0 %74
    %v77 = vmul.f32 %v50, %v75
    %v78 = vmul.f32 %v51, %v75
    %80 = vset.pattern.permute.xlu0 0
    %81 = vperm.xlu0 %80, %v71
    %v82 = vpop.permute.xlu0 %81
    %v84 = vadd.f32 %v77, %v82
    %v85 = vadd.f32 %v78, %v82
    %86 = vst [vmem:[#allocation8] sm:$0xff] %v84
    %87 = vst [vmem:[#allocation8 + $0x8] sm:$0xff] %v85
    // Predicated region
    $region26: #{tpu_custom_call.1} parent=1 // pred_check
      _
    $region27: #{tpu_custom_call.1} parent=1 // pred_check_branch
      %89 = sbr.rel (0) target = $region29
    $region28: #{tpu_custom_call.1} parent=1 // pred_region
      %s91 = ssub.s32 256, 256
      %92 = vsyncadd [#allocation4], %s91
      %s94 = sshll.u32 [#allocation8], 4
      %s95 = int_to_ptr.vmem [resolvable:$true] %s94
      %97 = dma.vmem_to_hbm [thread:$0]  %s95, 256, %s3, [#allocation4]
    $region29: #{tpu_custom_call.1} parent=1 // pred_fallthru
      _
    // Predicated region
    $region30: #{tpu_custom_call.1} parent=1 // pred_check
      _
    $region31: #{tpu_custom_call.1} parent=1 // pred_check_branch
      %99 = sbr.rel (0) target = $region33
    $region32: #{tpu_custom_call.1} parent=1 // pred_region
      %100 = dma.done [#allocation4], 256
    $region33: #{tpu_custom_call.1} parent=1 // pred_fallthru
      _
    %101 = vsyncpa [#allocation3], 1
    %102 = vsyncpa [#allocation6], 1
    %103 = vsyncpa [#allocation4], 1

</llo_original>
